<compile_context>
chip_gen: v6e
topology: v6e:2x2x1
jax: 0.10.0
libtpu: 0.0.40
codegen_flags: <defaults>
</compile_context>

<pallas_src>
import functools

import jax
import jax.numpy as jnp
from jax.experimental import pallas as pl
from jax.experimental.pallas import tpu as pltpu


_LANE = 128
_VMEM_LIMIT = 32 * 1024 * 1024  # safe scoped-VMEM budget on v5e/v6e/v7x at chosen tiles


def _round_up(x, m):
    return ((x + m - 1) // m) * m


def _block_spec(block_shape, index_map, buffers=None):
    """BlockSpec, with deeper multi-buffering where the installed Pallas supports it."""
    if buffers is not None and hasattr(pl, "Buffered"):
        try:
            return pl.BlockSpec(block_shape, index_map,
                                pipeline_mode=pl.Buffered(buffers))
        except TypeError:
            # Older Pallas without pipeline_mode: fall back to the default 2-deep pipeline.
            pass
    return pl.BlockSpec(block_shape, index_map)


# --------------------------- fused Pallas kernel ---------------------------

def _fused_backbone_fc_kernel(cols_ref, cw_ref, cb_ref, fw_ref, fb_ref, o_ref,
                              *, inv_hw, group_size):
    """conv3x3 (im2col matmul) + ReLU + global-avg-pool + FC [+ per-group max].

    Grid = (N-tiles,), all "parallel".  The tiny conv/GAP stage is recomputed at every
    weight-tile step (cheaper than a cross-step scratch, and safe under megacore
    sharding of the parallel axis); the FC weight tile streams from HBM and its wide
    output never leaves VMEM.
    """
    B, HW, Kc = cols_ref.shape

    # ---- conv as matmul + bias + ReLU, f32 accumulation -------------------
    x = cols_ref[...].reshape(B * HW, Kc)                       # (B*HW, Kc) bf16
    y = jnp.dot(x, cw_ref[...], preferred_element_type=jnp.float32)
    y = jnp.maximum(y + cb_ref[...], 0.0)                       # (B*HW, Cp) f32

    # ---- global average pool over HW --------------------------------------
    pooled = jnp.sum(y.reshape(B, HW, -1), axis=1) * inv_hw     # (B, Cp) f32
    pooled = pooled.astype(jnp.bfloat16)

    # ---- FC tile: bf16 MXU, f32 accumulation ------------------------------
    acc = jnp.dot(pooled, fw_ref[...], preferred_element_type=jnp.float32)
    acc = acc + fb_ref[...].astype(jnp.float32)                 # (B, tile_n) f32

    if group_size is None:
        o_ref[...] = acc.astype(o_ref.dtype)                    # plain logits tile
    else:
        # Fused F.max_pool1d(kernel_size=group_size): per-group max epilogue.
        # TODO(synk): at larger batch the (B, tile_n)->(B, g, group_size) reshape
        # forces a lane->sublane relayout before the XLU max; negligible at B=2.
        g = acc.shape[1] // group_size
        mx = jnp.max(acc.reshape(B, g, group_size), axis=-1)    # (B, gpt) f32
        o_ref[...] = mx[:, None, :].astype(o_ref.dtype)         # (B, 1, gpt)


def backbone_fc_max(cols, conv_w, conv_b, fc_w, fc_b, *,
                    group_size=512, groups_per_tile=49, weight_buffers=3):
    """Fused backbone + FC + per-group max.  Returns (B, S) with S = N / group_size."""
    B, HW, Kc = cols.shape
    Cp, N = fc_w.shape
    assert N % group_size == 0
    S = N // group_size
    assert S % groups_per_tile == 0
    nt = S // groups_per_tile                      # 196 / 49 = 4 (even, megacore-friendly)
    tile_n = groups_per_tile * group_size          # 49 * 512 = 25088 -> ~6.1 MiB bf16 tile

    out = pl.pallas_call(
        functools.partial(_fused_backbone_fc_kernel,
                          inv_hw=1.0 / HW, group_size=group_size),
        out_shape=jax.ShapeDtypeStruct((B, nt, groups_per_tile), jnp.float32),
        grid_spec=pltpu.PrefetchScalarGridSpec(
            num_scalar_prefetch=0,
            grid=(nt,),
            in_specs=[
                pl.BlockSpec((B, HW, Kc), lambda j: (0, 0, 0)),       # cols (resident)
                pl.BlockSpec((Kc, Cp), lambda j: (0, 0)),             # conv_w (resident)
                pl.BlockSpec((1, Cp), lambda j: (0, 0)),              # conv_b (resident)
                _block_spec((Cp, tile_n), lambda j: (0, j), weight_buffers),  # fc_w stream
                _block_spec((1, tile_n), lambda j: (0, j), weight_buffers),   # fc_b stream
            ],
            out_specs=pl.BlockSpec((B, 1, groups_per_tile), lambda j: (0, j, 0)),
        ),
        compiler_params=pltpu.CompilerParams(
            dimension_semantics=("parallel",),
            vmem_limit_bytes=_VMEM_LIMIT),
    )(cols, conv_w, conv_b, fc_w, fc_b)
    # seq index = j * groups_per_tile + g, so a plain reshape restores sequence order.
    return out.reshape(B, S)


def backbone_fc_logits(cols, conv_w, conv_b, fc_w, fc_b, *, tile_n=512):
    """Fused backbone + FC.  Returns (B, N_pad) logits (caller slices off padding)."""
    B, HW, Kc = cols.shape
    Cp, N = fc_w.shape
    assert N % tile_n == 0
    nt = N // tile_n

    return pl.pallas_call(
        functools.partial(_fused_backbone_fc_kernel,
                          inv_hw=1.0 / HW, group_size=None),
        out_shape=jax.ShapeDtypeStruct((B, N), jnp.float32),
        grid_spec=pltpu.PrefetchScalarGridSpec(
            num_scalar_prefetch=0,
            grid=(nt,),
            in_specs=[
                pl.BlockSpec((B, HW, Kc), lambda j: (0, 0, 0)),
                pl.BlockSpec((Kc, Cp), lambda j: (0, 0)),
                pl.BlockSpec((1, Cp), lambda j: (0, 0)),
                pl.BlockSpec((Cp, tile_n), lambda j: (0, j)),
                pl.BlockSpec((1, tile_n), lambda j: (0, j)),
            ],
            out_specs=pl.BlockSpec((B, tile_n), lambda j: (0, j)),
        ),
        compiler_params=pltpu.CompilerParams(
            dimension_semantics=("parallel",),
            vmem_limit_bytes=_VMEM_LIMIT),
    )(cols, conv_w, conv_b, fc_w, fc_b)


# --------------------------- glue (plain JAX) ---------------------------

def im2col_3x3(x_nhwc):
    """3x3 / stride 1 / pad 1 im2col.  (B,H,W,C) -> (B, H*W, 9*C)."""
    B, H, W, C = x_nhwc.shape
    xp = jnp.pad(x_nhwc, ((0, 0), (1, 1), (1, 1), (0, 0)))
    patches = []
    for dy in range(3):
        for dx in range(3):
            patches.append(xp[:, dy:dy + H, dx:dx + W, :])
    cols = jnp.concatenate(patches, axis=-1)                     # (B, H, W, 9*C)
    return cols.reshape(B, H * W, 9 * C)


class ImageFeaturesPallas:
    """JAX/Pallas port of ImageFeatures.

    coattention=False -> (B, num_classes) GoogLeNet-style logits/features
    coattention=True  -> (B, 196)  after view(B,196,512) + max_pool1d(512).squeeze(2)
    """

    # TODO(synk): the real GoogLeNet backbone is an external class not defined in the
    # reference module; it is replaced by a deterministic conv3x3+ReLU -> GAP -> FC
    # stand-in with the same output interface.
    def __init__(self, num_classes=1000, coattention=False, in_channels=4,
                 conv_channels=32, seed=0):
        self.coattention = coattention
        self.num_classes = num_classes
        k1, k2, k3 = jax.random.split(jax.random.PRNGKey(seed), 3)

        # TODO(synk): at real GoogLeNet sizes the 9*C im2col K dim (36 here) should be
        # padded to 128 / fused into the kernel with halo-tiled NHWC reads; negligible
        # at this toy 16x16 input.
        k_patch = 9 * in_channels
        c_pad = _round_up(conv_channels, _LANE)        # lane-dense conv output (128)
        conv_w = 0.05 * jax.random.normal(k1, (k_patch, conv_channels), jnp.float32)
        self.conv_w = (jnp.zeros((k_patch, c_pad), jnp.bfloat16)
                       .at[:, :conv_channels].set(conv_w.astype(jnp.bfloat16)))
        self.conv_b = jnp.zeros((1, c_pad), jnp.float32)

        self.out_dim = 196 * 512 if coattention else num_classes
        out_pad = self.out_dim if coattention else _round_up(num_classes, _LANE)
        self.out_pad = out_pad
        fc_w = 0.05 * jax.random.normal(k2, (conv_channels, self.out_dim), jnp.float32)
        fc_b = 0.01 * jax.random.normal(k3, (self.out_dim,), jnp.float32)
        # Zero-padded rows/cols: padded conv channels / padded classes contribute 0.
        self.fc_w = (jnp.zeros((c_pad, out_pad), jnp.bfloat16)
                     .at[:conv_channels, :self.out_dim].set(fc_w.astype(jnp.bfloat16)))
        self.fc_b = (jnp.zeros((1, out_pad), jnp.bfloat16)
                     .at[0, :self.out_dim].set(fc_b.astype(jnp.bfloat16)))

    def __call__(self, images_nchw):
        # PyTorch NCHW input -> NHWC for the kernels.
        x = jnp.transpose(images_nchw, (0, 2, 3, 1)).astype(jnp.float32)

        # TODO(synk): at real GoogLeNet image sizes the 3x3 gather should be fused into
        # the conv stage (halo-tiled NHWC reads); negligible at this toy 16x16 size.
        cols = im2col_3x3(x).astype(jnp.bfloat16)                # (B, HW, 9C)
        B = cols.shape[0]

        if self.coattention:
            # Fused conv+GAP+FC with per-512-column max
            #   ==  GoogLeNet(x).view(B,196,512) + max_pool1d(512).squeeze(2)
            return backbone_fc_max(cols, self.conv_w, self.conv_b,
                                   self.fc_w, self.fc_b,
                                   group_size=512, groups_per_tile=49)   # (B, 196)

        logits = backbone_fc_logits(cols, self.conv_w, self.conv_b,
                                    self.fc_w, self.fc_b, tile_n=512)    # (B, 1024)
        return logits[:, :self.num_classes]                              # (B, 1000)


if __name__ == "__main__":
    key = jax.random.PRNGKey(0)
    # Small PyTorch-style NCHW input: batch=2, channels=4, spatial=16x16.
    images = jax.random.normal(key, (2, 4, 16, 16), jnp.float32)

    # coattention=False path: GoogLeNet-style (B, num_classes) features.
    model_plain = ImageFeaturesPallas(num_classes=1000, coattention=False)
    out_plain = jax.block_until_ready(model_plain(images))
    assert out_plain.shape == (2, 1000), out_plain.shape

    # coattention=True path: view(B,196,512) + max_pool1d(512).squeeze(2) -> (B, 196).
    model_co = ImageFeaturesPallas(num_classes=1000, coattention=True)
    out_co = jax.block_until_ready(model_co(images))
    assert out_co.shape == (2, 196), out_co.shape

    print("KERNEL_OK")
</pallas_src>

<mosaic_0001>
module attributes {stable_mosaic.version = 11 : i64} {
  func.func @_fused_backbone_fc_kernel(%arg0: i32, %arg1: memref<2x256x36xbf16, #tpu.memory_space<vmem>>, %arg2: memref<36x128xbf16, #tpu.memory_space<vmem>>, %arg3: memref<1x128xf32, #tpu.memory_space<vmem>>, %arg4: memref<128x512xbf16, #tpu.memory_space<vmem>>, %arg5: memref<1x512xbf16, #tpu.memory_space<vmem>>, %arg6: memref<2x512xf32, #tpu.memory_space<vmem>>) attributes {dimension_semantics = [#tpu.dimension_semantics<parallel>], iteration_bounds = array<i64: 2>, scalar_prefetch = 0 : i64, scratch_operands = 0 : i64, tpu.core_type = #tpu.core_type<tc>, window_params = [{pipeline_mode = #tpu.pipeline_mode<synchronous>, transform_indices = @transform_0, window_bounds = array<i64: 2, 256, 36>}, {pipeline_mode = #tpu.pipeline_mode<synchronous>, transform_indices = @transform_1, window_bounds = array<i64: 36, 128>}, {pipeline_mode = #tpu.pipeline_mode<synchronous>, transform_indices = @transform_2, window_bounds = array<i64: 1, 128>}, {transform_indices = @transform_3, window_bounds = array<i64: 128, 512>}, {transform_indices = @transform_4, window_bounds = array<i64: 1, 512>}, {transform_indices = @transform_5, window_bounds = array<i64: 2, 512>}]} {
    %c0 = arith.constant 0 : index
    %c0_0 = arith.constant 0 : index
    %c0_1 = arith.constant 0 : index
    %0 = vector.load %arg1[%c0, %c0_0, %c0_1] : memref<2x256x36xbf16, #tpu.memory_space<vmem>>, vector<2x256x36xbf16>
    %1 = vector.shape_cast %0 : vector<2x256x36xbf16> to vector<512x36xbf16>
    %c0_2 = arith.constant 0 : index
    %c0_3 = arith.constant 0 : index
    %2 = vector.load %arg2[%c0_2, %c0_3] : memref<36x128xbf16, #tpu.memory_space<vmem>>, vector<36x128xbf16>
    %cst = arith.constant dense<0.000000e+00> : vector<512x128xf32>
    %3 = tpu.matmul %1, %2, %cst {dimension_numbers = #tpu.dot_dimension_numbers<[1], [0], [0], [1], [0, 0, 1, 1], [], []>} : vector<512x36xbf16>, vector<36x128xbf16>, vector<512x128xf32> -> vector<512x128xf32>
    %c0_4 = arith.constant 0 : index
    %c0_5 = arith.constant 0 : index
    %4 = vector.load %arg3[%c0_4, %c0_5] : memref<1x128xf32, #tpu.memory_space<vmem>>, vector<1x128xf32>
    %5 = vector.broadcast %4 : vector<1x128xf32> to vector<512x128xf32>
    %6 = arith.addf %3, %5 : vector<512x128xf32>
    %cst_6 = arith.constant 0.000000e+00 : f32
    %7 = vector.broadcast %cst_6 : f32 to vector<512x128xf32>
    %8 = arith.maximumf %6, %7 : vector<512x128xf32>
    %9 = vector.shape_cast %8 : vector<512x128xf32> to vector<2x256x128xf32>
    %cst_7 = arith.constant dense<0.000000e+00> : vector<2x128xf32>
    %10 = vector.multi_reduction <add>, %9, %cst_7 [1] : vector<2x256x128xf32> to vector<2x128xf32>
    %cst_8 = arith.constant 3.906250e-03 : f32
    %11 = vector.broadcast %cst_8 : f32 to vector<2x128xf32>
    %12 = arith.mulf %10, %11 : vector<2x128xf32>
    %13 = arith.truncf %12 : vector<2x128xf32> to vector<2x128xbf16>
    %c0_9 = arith.constant 0 : index
    %c0_10 = arith.constant 0 : index
    %14 = vector.load %arg4[%c0_9, %c0_10] : memref<128x512xbf16, #tpu.memory_space<vmem>>, vector<128x512xbf16>
    %cst_11 = arith.constant dense<0.000000e+00> : vector<2x512xf32>
    %15 = tpu.matmul %13, %14, %cst_11 {dimension_numbers = #tpu.dot_dimension_numbers<[1], [0], [0], [1], [0, 0, 1, 1], [], []>} : vector<2x128xbf16>, vector<128x512xbf16>, vector<2x512xf32> -> vector<2x512xf32>
    %c0_12 = arith.constant 0 : index
    %c0_13 = arith.constant 0 : index
    %16 = vector.load %arg5[%c0_12, %c0_13] : memref<1x512xbf16, #tpu.memory_space<vmem>>, vector<1x512xbf16>
    %17 = arith.extf %16 : vector<1x512xbf16> to vector<1x512xf32>
    %18 = vector.broadcast %17 : vector<1x512xf32> to vector<2x512xf32>
    %19 = arith.addf %15, %18 : vector<2x512xf32>
    %c0_14 = arith.constant 0 : index
    %c0_15 = arith.constant 0 : index
    %20 = vector.load %arg6[%c0_14, %c0_15] : memref<2x512xf32, #tpu.memory_space<vmem>>, vector<2x512xf32>
    tpu.vector_store %arg6[%c0_14, %c0_15], %19 {strides = array<i32>} : memref<2x512xf32, #tpu.memory_space<vmem>>, vector<2x512xf32>,
    return
  }
  func.func @transform_0(%arg0: i32) -> (i32, i32, i32) {
    %c0_i32 = arith.constant 0 : i32
    %c0_i32_0 = arith.constant 0 : i32
    %c0_i32_1 = arith.constant 0 : i32
    %c0_i32_2 = arith.constant 0 : i32
    return %c0_i32, %c0_i32_0, %c0_i32_1 : i32, i32, i32
  }
  func.func @transform_1(%arg0: i32) -> (i32, i32) {
    %c0_i32 = arith.constant 0 : i32
    %c0_i32_0 = arith.constant 0 : i32
    %c0_i32_1 = arith.constant 0 : i32
    return %c0_i32, %c0_i32_0 : i32, i32
  }
  func.func @transform_2(%arg0: i32) -> (i32, i32) {
    %c0_i32 = arith.constant 0 : i32
    %c0_i32_0 = arith.constant 0 : i32
    %c0_i32_1 = arith.constant 0 : i32
    return %c0_i32, %c0_i32_0 : i32, i32
  }
  func.func @transform_3(%arg0: i32) -> (i32, i32) {
    %c0_i32 = arith.constant 0 : i32
    %c0_i32_0 = arith.constant 0 : i32
    return %c0_i32, %arg0 : i32, i32
  }
  func.func @transform_4(%arg0: i32) -> (i32, i32) {
    %c0_i32 = arith.constant 0 : i32
    %c0_i32_0 = arith.constant 0 : i32
    return %c0_i32, %arg0 : i32, i32
  }
  func.func @transform_5(%arg0: i32) -> (i32, i32) {
    %c0_i32 = arith.constant 0 : i32
    %c0_i32_0 = arith.constant 0 : i32
    return %c0_i32, %arg0 : i32, i32
  }
}

</mosaic_0001>

<llo_original>
// kernel: tpu_custom_call.1
$region0: #{tpu_custom_call.1}
  #allocation0 [shape = 'u32[]', space=smem, size = 0x4, offset = 0x4, fixed_abs, tag = 'smem constant byte address 0x4 - core index']
  #allocation1 [shape = 'u32[144,128]{1,0:T(1,128)}', space=vmem, size = 0x12000, scoped, tag = 'internal scratch']
  %s0 = inlined_call_operand.vmem [shape: bf16[2,256,36], index: 0, kind: input, shape index: {}]
  %s1 = inlined_call_operand.vmem [shape: bf16[36,128], index: 1, kind: input, shape index: {}]
  %s2 = inlined_call_operand.vmem [shape: f32[1,128], index: 2, kind: input, shape index: {}]
  %s3 = inlined_call_operand.hbm [shape: bf16[128,1024], index: 3, kind: input, shape index: {}]
  %s4 = inlined_call_operand.vmem [shape: bf16[1,1024], index: 4, kind: input, shape index: {}]
  %s5 = inlined_call_operand.hbm [shape: f32[2,1024], index: 5, kind: output, shape index: {}]
  %s6 = sld [smem:[#allocation0]]
  $region57: #{tpu_custom_call.1} parent=0
    _
  %s8 = ssub.s32 1, %s6
  %s9 = scalar_select 0, %s8, %s6
  $region1: #{tpu_custom_call.1} parent=0
    #allocation2 [shape = 'u8[262144]{0}', space=vmem, size = 0x40000, scoped, tag = 'input window, operand 3']
    #allocation3 [shape = 's32[2]{0}', space=sflag, size = 0x8, scoped, tag = 'scoped memory for tpu_custom_call.1']
    #allocation4 [shape = 's32[2]{0}', space=sflag, size = 0x8, scoped, tag = 'scoped memory for tpu_custom_call.1']
    #allocation5 [shape = 'u8[8192]{0}', space=vmem, size = 0x2000, scoped, tag = 'output window, operand 0']
    %10 = vsyncpa [#allocation3], 0
    %s11 = scalar_lea.sflag [#allocation3], 1
    %12 = vsyncpa %s11, 0
    %13 = vsyncpa [#allocation4], 0
    %s14 = scalar_lea.sflag [#allocation4], 1
    %15 = vsyncpa %s14, 0
    loop: start=0, step=1, limit=4
    $region2: #{tpu_custom_call.1} parent=1 // loop_pre_header
      _
    $region3: #{tpu_custom_call.1} parent=1 // loop_header
      %s17 = sphi 0, %s21
      %p18 = scmp.ge.s32.totalorder %s17, 4
      %s25 = sphi 0, %s25
      %s27 = sphi 0, %s25
      %s28 = sphi 0, %s27
      %s42 = sphi 0, %s28
      %s46 = sphi 0, %s46
      %s48 = sphi 0, %s46
      %s49 = sphi 0, %s48
      %s63 = sphi 0, %s49
      %s67 = sphi 0, %s67
      %s69 = sphi 0, %s67
      %s70 = sphi 0, %s69
      %s84 = sphi 0, %s70
      %s90 = sphi 0, %s92
      %s93 = sphi 0, %s90
      %s94 = sphi 0, %s93
      %s110 = sphi 0, %s94
      %s116 = sphi 0, %s118
      %s119 = sphi 0, %s116
      %s120 = sphi 0, %s119
      %s136 = sphi 0, %s120
      %s142 = sphi 0, %s144
      %s145 = sphi 0, %s142
      %s146 = sphi 0, %s145
      %s162 = sphi 0, %s146
    $region4: #{tpu_custom_call.1} parent=1 // loop_header_branch
      %20 = sbr.rel (%p18) target = $region8
    $region5: #{tpu_custom_call.1} parent=1 // loop_body
      %s22 = ssub.s32 %s17, 1
      %s23 = ssub.s32 %s17, 2
      %s24 = sadd.s32 %s17, 1
      %s26 = sadd.s32 %s25, 1
      %p29 = scmp.eq.s32.totalorder %s17, 1
      %p30 = scmp.ne.s32.totalorder %s25, %s27
      %p31 = scmp.eq.s32.totalorder %s17, 0
      %p32 = por %p30, %p31
      %p33 = scmp.ne.s32.totalorder %s25, %s27
      %p34 = scmp.eq.s32.totalorder %s22, 1
      %p35 = por %p33, %p34
      %p36 = scmp.ne.s32.totalorder %s27, %s28
      %p37 = scmp.eq.s32.totalorder %s22, 0
      %p38 = por %p36, %p37
      %p39 = scmp.ne.s32.totalorder %s27, %s28
      %p40 = scmp.eq.s32.totalorder %s23, 1
      %p41 = por %p39, %p40
      %p43 = scmp.ne.s32.totalorder %s28, %s42
      %p44 = scmp.eq.s32.totalorder %s23, 0
      %p45 = por %p43, %p44
      %s47 = sadd.s32 %s46, 1
      %p50 = scmp.eq.s32.totalorder %s17, 1
      %p51 = scmp.ne.s32.totalorder %s46, %s48
      %p52 = scmp.eq.s32.totalorder %s17, 0
      %p53 = por %p51, %p52
      %p54 = scmp.ne.s32.totalorder %s46, %s48
      %p55 = scmp.eq.s32.totalorder %s22, 1
      %p56 = por %p54, %p55
      %p57 = scmp.ne.s32.totalorder %s48, %s49
      %p58 = scmp.eq.s32.totalorder %s22, 0
      %p59 = por %p57, %p58
      %p60 = scmp.ne.s32.totalorder %s48, %s49
      %p61 = scmp.eq.s32.totalorder %s23, 1
      %p62 = por %p60, %p61
      %p64 = scmp.ne.s32.totalorder %s49, %s63
      %p65 = scmp.eq.s32.totalorder %s23, 0
      %p66 = por %p64, %p65
      %s68 = sadd.s32 %s67, 1
      %p71 = scmp.eq.s32.totalorder %s17, 1
      %p72 = scmp.ne.s32.totalorder %s67, %s69
      %p73 = scmp.eq.s32.totalorder %s17, 0
      %p74 = por %p72, %p73
      %p75 = scmp.ne.s32.totalorder %s67, %s69
      %p76 = scmp.eq.s32.totalorder %s22, 1
      %p77 = por %p75, %p76
      %p78 = scmp.ne.s32.totalorder %s69, %s70
      %p79 = scmp.eq.s32.totalorder %s22, 0
      %p80 = por %p78, %p79
      %p81 = scmp.ne.s32.totalorder %s69, %s70
      %p82 = scmp.eq.s32.totalorder %s23, 1
      %p83 = por %p81, %p82
      %p85 = scmp.ne.s32.totalorder %s70, %s84
      %p86 = scmp.eq.s32.totalorder %s23, 0
      %p87 = por %p85, %p86
      %s88 = ssub.s32 %s17, %s24
      %p89 = scmp.eq.s32.totalorder %s88, 0
      %s91 = sadd.s32 %s90, 1
      %s92 = scalar_select %p89, %s90, %s91
      %p95 = pneg %p89
      %p96 = scmp.eq.s32.totalorder %s17, 1
      %p97 = por %p95, %p96
      %p98 = scmp.ne.s32.totalorder %s90, %s93
      %p99 = scmp.eq.s32.totalorder %s17, 0
      %p100 = por %p98, %p99
      %p101 = scmp.ne.s32.totalorder %s90, %s93
      %p102 = scmp.eq.s32.totalorder %s22, 1
      %p103 = por %p101, %p102
      %p104 = scmp.ne.s32.totalorder %s93, %s94
      %p105 = scmp.eq.s32.totalorder %s22, 0
      %p106 = por %p104, %p105
      %p107 = scmp.ne.s32.totalorder %s93, %s94
      %p108 = scmp.eq.s32.totalorder %s23, 1
      %p109 = por %p107, %p108
      %p111 = scmp.ne.s32.totalorder %s94, %s110
      %p112 = scmp.eq.s32.totalorder %s23, 0
      %p113 = por %p111, %p112
      %s114 = ssub.s32 %s17, %s24
      %p115 = scmp.eq.s32.totalorder %s114, 0
      %s117 = sadd.s32 %s116, 1
      %s118 = scalar_select %p115, %s116, %s117
      %p121 = pneg %p115
      %p122 = scmp.eq.s32.totalorder %s17, 1
      %p123 = por %p121, %p122
      %p124 = scmp.ne.s32.totalorder %s116, %s119
      %p125 = scmp.eq.s32.totalorder %s17, 0
      %p126 = por %p124, %p125
      %p127 = scmp.ne.s32.totalorder %s116, %s119
      %p128 = scmp.eq.s32.totalorder %s22, 1
      %p129 = por %p127, %p128
      %p130 = scmp.ne.s32.totalorder %s119, %s120
      %p131 = scmp.eq.s32.totalorder %s22, 0
      %p132 = por %p130, %p131
      %p133 = scmp.ne.s32.totalorder %s119, %s120
      %p134 = scmp.eq.s32.totalorder %s23, 1
      %p135 = por %p133, %p134
      %p137 = scmp.ne.s32.totalorder %s120, %s136
      %p138 = scmp.eq.s32.totalorder %s23, 0
      %p139 = por %p137, %p138
      %s140 = ssub.s32 %s17, %s24
      %p141 = scmp.eq.s32.totalorder %s140, 0
      %s143 = sadd.s32 %s142, 1
      %s144 = scalar_select %p141, %s142, %s143
      %p147 = pneg %p141
      %p148 = scmp.eq.s32.totalorder %s17, 1
      %p149 = por %p147, %p148
      %p150 = scmp.ne.s32.totalorder %s142, %s145
      %p151 = scmp.eq.s32.totalorder %s17, 0
      %p152 = por %p150, %p151
      %p153 = scmp.ne.s32.totalorder %s142, %s145
      %p154 = scmp.eq.s32.totalorder %s22, 1
      %p155 = por %p153, %p154
      %p156 = scmp.ne.s32.totalorder %s145, %s146
      %p157 = scmp.eq.s32.totalorder %s22, 0
      %p158 = por %p156, %p157
      %p159 = scmp.ne.s32.totalorder %s145, %s146
      %p160 = scmp.eq.s32.totalorder %s23, 1
      %p161 = por %p159, %p160
      %p163 = scmp.ne.s32.totalorder %s146, %s162
      %p164 = scmp.eq.s32.totalorder %s23, 0
      %p165 = por %p163, %p164
      %p166 = scmp.le.s32.totalorder 1, %s17
      %p167 = scmp.lt.s32.totalorder %s17, 3
      %p168 = pnand %p166, %p167
      %p169 = pneg %p168
      // Predicated region
      $region9: #{tpu_custom_call.1} parent=5 // pred_check
        _
      $region10: #{tpu_custom_call.1} parent=5 // pred_check_branch
        %171 = sbr.rel (%p168) target = $region12
      $region11: #{tpu_custom_call.1} parent=5 // pred_region
        %s172 = ssub.s32 %s17, 1
        // Predicated region
        $region13: #{tpu_custom_call.1} parent=11 // pred_check
          %p173 = pneg %p38
        $region14: #{tpu_custom_call.1} parent=11 // pred_check_branch
          %175 = sbr.rel (%p173) target = $region16
        $region15: #{tpu_custom_call.1} parent=11 // pred_region
          _
        $region16: #{tpu_custom_call.1} parent=11 // pred_fallthru
          _
        // Predicated region
        $region17: #{tpu_custom_call.1} parent=11 // pred_check
          %p176 = pneg %p59
        $region18: #{tpu_custom_call.1} parent=11 // pred_check_branch
          %178 = sbr.rel (%p176) target = $region20
        $region19: #{tpu_custom_call.1} parent=11 // pred_region
          _
        $region20: #{tpu_custom_call.1} parent=11 // pred_fallthru
          _
        // Predicated region
        $region21: #{tpu_custom_call.1} parent=11 // pred_check
          %p179 = pneg %p80
        $region22: #{tpu_custom_call.1} parent=11 // pred_check_branch
          %181 = sbr.rel (%p179) target = $region24
        $region23: #{tpu_custom_call.1} parent=11 // pred_region
          _
        $region24: #{tpu_custom_call.1} parent=11 // pred_fallthru
          _
      $region12: #{tpu_custom_call.1} parent=5 // pred_fallthru
        _
      %p182 = scmp.lt.s32.totalorder %s17, 2
      // Predicated region
      $region25: #{tpu_custom_call.1} parent=5 // pred_check
        %p183 = pneg %p182
      $region26: #{tpu_custom_call.1} parent=5 // pred_check_branch
        %185 = sbr.rel (%p183) target = $region28
      $region27: #{tpu_custom_call.1} parent=5 // pred_region
        // Predicated region
        $region29: #{tpu_custom_call.1} parent=27 // pred_check
          %p186 = pneg %p100
        $region30: #{tpu_custom_call.1} parent=27 // pred_check_branch
          %188 = sbr.rel (%p186) target = $region32
        $region31: #{tpu_custom_call.1} parent=27 // pred_region
          %s189 = sand.u32 %s90, 1
          %s190 = scalar_lea.sflag [#allocation3], %s189
          %s191 = sand.u32 %s90, 1
          %s192 = smul.addr %s191, 256
          %s193 = scalar_lea.vmem [#allocation2], %s192
          %s194 = smul.u32 4, %s17
          %s196 = ssub.s32 4096, 4096
          %197 = vsyncadd %s190, %s196
          %s198 = smul.addr %s194, 64
          %s199 = scalar_lea.hbm %s3, %s198
          %s200 = sshll.u32 %s193, 4
          %s201 = int_to_ptr.vmem [resolvable:$true] %s200
          %206 = dma.hbm_to_vmem [thread:$0]  %s199, 4096, %s201, %s190, 512, 256, 16
        $region32: #{tpu_custom_call.1} parent=27 // pred_fallthru
          _
        // Predicated region
        $region33: #{tpu_custom_call.1} parent=27 // pred_check
          %p207 = pneg %p126
        $region34: #{tpu_custom_call.1} parent=27 // pred_check_branch
          %209 = sbr.rel (%p207) target = $region36
        $region35: #{tpu_custom_call.1} parent=27 // pred_region
          %s210 = smul.u32 4, %s17
          %p211 = scmp.lt.s32.totalorder %s210, 7
          %s212 = scalar_select %p211, %s210, 7
          %s213 = scalar_lea.vmem %s4, %s212
          %s214 = smul.u32 4, %s17
        $region36: #{tpu_custom_call.1} parent=27 // pred_fallthru
          _
      $region28: #{tpu_custom_call.1} parent=5 // pred_fallthru
        _
      %p215 = scmp.le.s32.totalorder 1, %s17
      %p216 = scmp.lt.s32.totalorder %s17, 3
      %p217 = pnand %p215, %p216
      %p218 = pneg %p217
      // Predicated region
      $region37: #{tpu_custom_call.1} parent=5 // pred_check
        _
      $region38: #{tpu_custom_call.1} parent=5 // pred_check_branch
        %220 = sbr.rel (%p217) target = $region40
      $region39: #{tpu_custom_call.1} parent=5 // pred_region
        %s221 = ssub.s32 %s17, 1
        %s222 = sand.u32 %s93, 1
        %s223 = scalar_lea.sflag [#allocation3], %s222
        %s224 = sand.u32 %s93, 1
        %s225 = smul.addr %s224, 256
        %s226 = scalar_lea.vmem [#allocation2], %s225
        // Predicated region
        $region41: #{tpu_custom_call.1} parent=39 // pred_check
          %p227 = pneg %p106
        $region42: #{tpu_custom_call.1} parent=39 // pred_check_branch
          %229 = sbr.rel (%p227) target = $region44
        $region43: #{tpu_custom_call.1} parent=39 // pred_region
          %230 = dma.done %s223, 4096
        $region44: #{tpu_custom_call.1} parent=39 // pred_fallthru
          _
        %p231 = pneg %p38
        %p232 = pneg %p35
        %p233 = pneg %p59
        %p234 = pneg %p56
        %p235 = pneg %p80
        %p236 = pneg %p77
        %s237 = sand.u32 %s93, 1
        %s238 = scalar_lea.sflag [#allocation3], %s237
        %s239 = sand.u32 %s93, 1
        %s240 = smul.addr %s239, 256
        %s241 = scalar_lea.vmem [#allocation2], %s240
        %p242 = pneg %p106
        %p243 = pneg %p103
        %s244 = smul.u32 4, %s22
        %p245 = scmp.lt.s32.totalorder %s244, 7
        %s246 = scalar_select %p245, %s244, 7
        %s247 = scalar_lea.vmem %s4, %s246
        %p248 = pneg %p132
        %p249 = pneg %p129
        %p250 = pneg %p158
        %p251 = pneg %p155
        %s252 = sand.u32 %s145, 1
        %s253 = scalar_lea.sflag [#allocation4], %s252
        %s254 = sand.u32 %s145, 1
        %s255 = smul.addr %s254, 8
        %s256 = scalar_lea.vmem [#allocation5], %s255
        %s257 = smul.u32 4, %s22
        %s258 = smul.u32 4, %s22
        %p259 = scmp.lt.s32.totalorder %s258, 7
        %s260 = scalar_select %p259, %s258, 7
        %s261 = scalar_lea.vmem %s4, %s260
        %s262 = smul.u32 4, %s22
        %s263 = smul.u32 4, %s22
        %v265 = vld [vmem:[%s0] sm:$0xf]
        %v266 = vld [vmem:[%s0 + $0x4] sm:$0xf]
        %v267 = vld [vmem:[%s0 + $0x8] sm:$0xf]
        %v268 = vld [vmem:[%s0 + $0xc] sm:$0xf]
        %v269 = vld [vmem:[%s0 + $0x10] sm:$0xf]
        %v270 = vld [vmem:[%s0 + $0x14] sm:$0xf]
        %v271 = vld [vmem:[%s0 + $0x18] sm:$0xf]
        %v272 = vld [vmem:[%s0 + $0x1c] sm:$0xf]
        %v273 = vld [vmem:[%s0 + $0x20] sm:$0xf]
        %v274 = vld [vmem:[%s0 + $0x24] sm:$0xf]
        %v275 = vld [vmem:[%s0 + $0x28] sm:$0xf]
        %v276 = vld [vmem:[%s0 + $0x2c] sm:$0xf]
        %v277 = vld [vmem:[%s0 + $0x30] sm:$0xf]
        %v278 = vld [vmem:[%s0 + $0x34] sm:$0xf]
        %v279 = vld [vmem:[%s0 + $0x38] sm:$0xf]
        %v280 = vld [vmem:[%s0 + $0x3c] sm:$0xf]
        %v281 = vld [vmem:[%s0 + $0x40] sm:$0xf]
        %v282 = vld [vmem:[%s0 + $0x44] sm:$0xf]
        %v283 = vld [vmem:[%s0 + $0x48] sm:$0xf]
        %v284 = vld [vmem:[%s0 + $0x4c] sm:$0xf]
        %v285 = vld [vmem:[%s0 + $0x50] sm:$0xf]
        %v286 = vld [vmem:[%s0 + $0x54] sm:$0xf]
        %v287 = vld [vmem:[%s0 + $0x58] sm:$0xf]
        %v288 = vld [vmem:[%s0 + $0x5c] sm:$0xf]
        %v289 = vld [vmem:[%s0 + $0x60] sm:$0xf]
        %v290 = vld [vmem:[%s0 + $0x64] sm:$0xf]
        %v291 = vld [vmem:[%s0 + $0x68] sm:$0xf]
        %v292 = vld [vmem:[%s0 + $0x6c] sm:$0xf]
        %v293 = vld [vmem:[%s0 + $0x70] sm:$0xf]
        %v294 = vld [vmem:[%s0 + $0x74] sm:$0xf]
        %v295 = vld [vmem:[%s0 + $0x78] sm:$0xf]
        %v296 = vld [vmem:[%s0 + $0x7c] sm:$0xf]
        %v297 = vld [vmem:[%s0 + $0x80] sm:$0xf]
        %v298 = vld [vmem:[%s0 + $0x84] sm:$0xf]
        %v299 = vld [vmem:[%s0 + $0x88] sm:$0xf]
        %v300 = vld [vmem:[%s0 + $0x8c] sm:$0xf]
        %v301 = vld [vmem:[%s0 + $0x90] sm:$0xf]
        %v302 = vld [vmem:[%s0 + $0x94] sm:$0xf]
        %v303 = vld [vmem:[%s0 + $0x98] sm:$0xf]
        %v304 = vld [vmem:[%s0 + $0x9c] sm:$0xf]
        %v305 = vld [vmem:[%s0 + $0xa0] sm:$0xf]
        %v306 = vld [vmem:[%s0 + $0xa4] sm:$0xf]
        %v307 = vld [vmem:[%s0 + $0xa8] sm:$0xf]
        %v308 = vld [vmem:[%s0 + $0xac] sm:$0xf]
        %v309 = vld [vmem:[%s0 + $0xb0] sm:$0xf]
        %v310 = vld [vmem:[%s0 + $0xb4] sm:$0xf]
        %v311 = vld [vmem:[%s0 + $0xb8] sm:$0xf]
        %v312 = vld [vmem:[%s0 + $0xbc] sm:$0xf]
        %v313 = vld [vmem:[%s0 + $0xc0] sm:$0xf]
        %v314 = vld [vmem:[%s0 + $0xc4] sm:$0xf]
        %v315 = vld [vmem:[%s0 + $0xc8] sm:$0xf]
        %v316 = vld [vmem:[%s0 + $0xcc] sm:$0xf]
        %v317 = vld [vmem:[%s0 + $0xd0] sm:$0xf]
        %v318 = vld [vmem:[%s0 + $0xd4] sm:$0xf]
        %v319 = vld [vmem:[%s0 + $0xd8] sm:$0xf]
        %v320 = vld [vmem:[%s0 + $0xdc] sm:$0xf]
        %v321 = vld [vmem:[%s0 + $0xe0] sm:$0xf]
        %v322 = vld [vmem:[%s0 + $0xe4] sm:$0xf]
        %v323 = vld [vmem:[%s0 + $0xe8] sm:$0xf]
        %v324 = vld [vmem:[%s0 + $0xec] sm:$0xf]
        %v325 = vld [vmem:[%s0 + $0xf0] sm:$0xf]
        %v326 = vld [vmem:[%s0 + $0xf4] sm:$0xf]
        %v327 = vld [vmem:[%s0 + $0xf8] sm:$0xf]
        %v328 = vld [vmem:[%s0 + $0xfc] sm:$0xf]
        %v329 = vld [vmem:[%s1] sm:$0xf]
        %v330 = vld [vmem:[%s1 + $0x4] sm:$0xf]
        %v331 = vld [vmem:[%s1 + $0x8] sm:$0xf]
        %v332 = vld [vmem:[%s1 + $0xc] sm:$0xf]
        %v333 = vld [vmem:[%s1 + $0x10] sm:$0x3]
        %v334 = vld [vmem:[%s2] sm:$0x1]
        %v336 = vlaneseq
        %v337 = vshrl.u32 %v336, 7
        %v338 = vsub.s32 0, %v337
        %v339 = vrot.slane %v334, %v338
        %v405 = vunpack.c.l.b16 %v265
        %v406 = vunpack.c.l.b16 %v266
        %v407 = vunpack.c.l.b16 %v267
        %v408 = vunpack.c.l.b16 %v268
        %v409 = vunpack.c.l.b16 %v269
        %v410 = vunpack.c.l.b16 %v270
        %v411 = vunpack.c.l.b16 %v271
        %v412 = vunpack.c.l.b16 %v272
        %v413 = vunpack.c.l.b16 %v273
        %v414 = vunpack.c.l.b16 %v274
        %v415 = vunpack.c.l.b16 %v275
        %v416 = vunpack.c.l.b16 %v276
        %v417 = vunpack.c.l.b16 %v277
        %v418 = vunpack.c.l.b16 %v278
        %v419 = vunpack.c.l.b16 %v279
        %v420 = vunpack.c.l.b16 %v280
        %v421 = vunpack.c.l.b16 %v281
        %v422 = vunpack.c.l.b16 %v282
        %v423 = vunpack.c.l.b16 %v283
        %v424 = vunpack.c.l.b16 %v284
        %v425 = vunpack.c.l.b16 %v285
        %v426 = vunpack.c.l.b16 %v286
        %v427 = vunpack.c.l.b16 %v287
        %v428 = vunpack.c.l.b16 %v288
        %v429 = vunpack.c.l.b16 %v289
        %v430 = vunpack.c.l.b16 %v290
        %v431 = vunpack.c.l.b16 %v291
        %v432 = vunpack.c.l.b16 %v292
        %v433 = vunpack.c.l.b16 %v293
        %v434 = vunpack.c.l.b16 %v294
        %v435 = vunpack.c.l.b16 %v295
        %v436 = vunpack.c.l.b16 %v296
        %v437 = vunpack.c.l.b16 %v297
        %v438 = vunpack.c.l.b16 %v298
        %v439 = vunpack.c.l.b16 %v299
        %v440 = vunpack.c.l.b16 %v300
        %v441 = vunpack.c.l.b16 %v301
        %v442 = vunpack.c.l.b16 %v302
        %v443 = vunpack.c.l.b16 %v303
        %v444 = vunpack.c.l.b16 %v304
        %v445 = vunpack.c.l.b16 %v305
        %v446 = vunpack.c.l.b16 %v306
        %v447 = vunpack.c.l.b16 %v307
        %v448 = vunpack.c.l.b16 %v308
        %v449 = vunpack.c.l.b16 %v309
        %v450 = vunpack.c.l.b16 %v310
        %v451 = vunpack.c.l.b16 %v311
        %v452 = vunpack.c.l.b16 %v312
        %v453 = vunpack.c.l.b16 %v313
        %v454 = vunpack.c.l.b16 %v314
        %v455 = vunpack.c.l.b16 %v315
        %v456 = vunpack.c.l.b16 %v316
        %v457 = vunpack.c.l.b16 %v317
        %v458 = vunpack.c.l.b16 %v318
        %v459 = vunpack.c.l.b16 %v319
        %v460 = vunpack.c.l.b16 %v320
        %v461 = vunpack.c.l.b16 %v321
        %v462 = vunpack.c.l.b16 %v322
        %v463 = vunpack.c.l.b16 %v323
        %v464 = vunpack.c.l.b16 %v324
        %v465 = vunpack.c.l.b16 %v325
        %v466 = vunpack.c.l.b16 %v326
        %v467 = vunpack.c.l.b16 %v327
        %v468 = vunpack.c.l.b16 %v328
        %v469 = vpack.c.b16 %v406, %v405
        %v470 = vpack.c.b16 %v408, %v407
        %v471 = vpack.c.b16 %v410, %v409
        %v472 = vpack.c.b16 %v412, %v411
        %v473 = vpack.c.b16 %v414, %v413
        %v474 = vpack.c.b16 %v416, %v415
        %v475 = vpack.c.b16 %v418, %v417
        %v476 = vpack.c.b16 %v420, %v419
        %v477 = vpack.c.b16 %v422, %v421
        %v478 = vpack.c.b16 %v424, %v423
        %v479 = vpack.c.b16 %v426, %v425
        %v480 = vpack.c.b16 %v428, %v427
        %v481 = vpack.c.b16 %v430, %v429
        %v482 = vpack.c.b16 %v432, %v431
        %v483 = vpack.c.b16 %v434, %v433
        %v484 = vpack.c.b16 %v436, %v435
        %v485 = vpack.c.b16 %v438, %v437
        %v486 = vpack.c.b16 %v440, %v439
        %v487 = vpack.c.b16 %v442, %v441
        %v488 = vpack.c.b16 %v444, %v443
        %v489 = vpack.c.b16 %v446, %v445
        %v490 = vpack.c.b16 %v448, %v447
        %v491 = vpack.c.b16 %v450, %v449
        %v492 = vpack.c.b16 %v452, %v451
        %v493 = vpack.c.b16 %v454, %v453
        %v494 = vpack.c.b16 %v456, %v455
        %v495 = vpack.c.b16 %v458, %v457
        %v496 = vpack.c.b16 %v460, %v459
        %v497 = vpack.c.b16 %v462, %v461
        %v498 = vpack.c.b16 %v464, %v463
        %v499 = vpack.c.b16 %v466, %v465
        %v500 = vpack.c.b16 %v468, %v467
        %v506 = vunpack.c.l.b16 %v329
        %v507 = vunpack.c.l.b16 %v330
        %v508 = vunpack.c.l.b16 %v331
        %v509 = vunpack.c.l.b16 %v332
        %v510 = vunpack.c.l.b16 %v333
        %v511 = vpack.c.b16 %v507, %v506
        %v512 = vpack.c.b16 %v509, %v508
        %v513 = vpack.c.b16 %v510, %v510
        %vm516 = vcmask 293888
        %v518 = vsel %vm516, %v469, 0
        %v521 = vsel %vm516, %v470, 0
        %v524 = vsel %vm516, %v471, 0
        %v527 = vsel %vm516, %v472, 0
        %v530 = vsel %vm516, %v473, 0
        %v533 = vsel %vm516, %v474, 0
        %v536 = vsel %vm516, %v475, 0
        %v539 = vsel %vm516, %v476, 0
        %v542 = vsel %vm516, %v477, 0
        %v545 = vsel %vm516, %v478, 0
        %v548 = vsel %vm516, %v479, 0
        %v551 = vsel %vm516, %v480, 0
        %v554 = vsel %vm516, %v481, 0
        %v557 = vsel %vm516, %v482, 0
        %v560 = vsel %vm516, %v483, 0
        %v563 = vsel %vm516, %v484, 0
        %v566 = vsel %vm516, %v485, 0
        %v569 = vsel %vm516, %v486, 0
        %v572 = vsel %vm516, %v487, 0
        %v575 = vsel %vm516, %v488, 0
        %v578 = vsel %vm516, %v489, 0
        %v581 = vsel %vm516, %v490, 0
        %v584 = vsel %vm516, %v491, 0
        %v587 = vsel %vm516, %v492, 0
        %v590 = vsel %vm516, %v493, 0
        %v593 = vsel %vm516, %v494, 0
        %v596 = vsel %vm516, %v495, 0
        %v599 = vsel %vm516, %v496, 0
        %v602 = vsel %vm516, %v497, 0
        %v605 = vsel %vm516, %v498, 0
        %v608 = vsel %vm516, %v499, 0
        %v611 = vsel %vm516, %v500, 0
        %vm613 = vcmask 1041408
        %v615 = vsel %vm613, %v513, 0
        %617 = vmatprep.subr.bf16.mxu0 0
        %618 = vmatpush1.bf16.msra.mxu0 0
        %619 = vmatprep.subr.bf16.mxu0 0
        %620 = vmatpush1.bf16.msra.mxu0 0
        %621 = vmatprep.subr.bf16.mxu0 0
        %622 = vmatpush1.bf16.msra.mxu0 0
        %623 = vmatprep.subr.bf16.mxu0 0
        %624 = vmatpush1.bf16.msra.mxu0 0
        %625 = vmatprep.subr.bf16.mxu0 0
        %626 = vmatpush1.bf16.msra.mxu0 0
        %627 = vmatprep.subr.bf16.mxu0 0
        %628 = vmatpush1.bf16.msra.mxu0 %v615
        %629 = vmatprep.subr.bf16.mxu0 0
        %630 = vmatpush1.bf16.msra.mxu0 %v512
        %631 = vmatprep.subr.bf16.mxu0 0
        %632 = vmatpush1.bf16.msra.mxu0 %v511
        %633 = vmatprep.subr.bf16.mxu0 0
        %634 = vmatpush2.bf16.msra.mxu0 0
        %635 = vmatprep.subr.bf16.mxu0 0
        %636 = vmatpush2.bf16.msra.mxu0 0
        %637 = vmatprep.subr.bf16.mxu0 0
        %638 = vmatpush2.bf16.msra.mxu0 0
        %639 = vmatprep.subr.bf16.mxu0 0
        %640 = vmatpush2.bf16.msra.mxu0 0
        %641 = vmatprep.subr.bf16.mxu0 0
        %642 = vmatpush2.bf16.msra.mxu0 0
        %643 = vmatprep.subr.bf16.mxu0 0
        %644 = vmatpush2.bf16.msra.mxu0 0
        %645 = vmatprep.subr.bf16.mxu0 0
        %646 = vmatpush2.bf16.msra.mxu0 0
        %647 = vmatprep.subr.bf16.mxu0 0
        %648 = vmatpush2.bf16.msra.mxu0 0
        %649 = vmatprep.mubr.bf16.mxu0 0
        %650 = vmatmul.mubr.bf16.gmra.mxu0 %v518
        %v651 = vpop.f32.mrf.mxu0
        %v652 = vadd.f32 %v339, %v651
        %v653 = vpop.f32.mrf.mxu0
        %v654 = vpop.f32.mrf.mxu0
        %v655 = vadd.f32 %v339, %v654
        %v656 = vpop.f32.mrf.mxu0
        %657 = vmatprep.mubr.bf16.mxu0 0
        %658 = vmatmul.mubr.bf16.gmra.mxu0 %v521
        %v659 = vpop.f32.mrf.mxu0
        %v660 = vadd.f32 %v339, %v659
        %v661 = vpop.f32.mrf.mxu0
        %v662 = vpop.f32.mrf.mxu0
        %v663 = vadd.f32 %v339, %v662
        %v664 = vpop.f32.mrf.mxu0
        %665 = vmatprep.mubr.bf16.mxu0 0
        %666 = vmatmul.mubr.bf16.gmra.mxu0 %v524
        %v667 = vpop.f32.mrf.mxu0
        %v668 = vadd.f32 %v339, %v667
        %v669 = vpop.f32.mrf.mxu0
        %v670 = vpop.f32.mrf.mxu0
        %v671 = vadd.f32 %v339, %v670
        %v672 = vpop.f32.mrf.mxu0
        %673 = vmatprep.mubr.bf16.mxu0 0
        %674 = vmatmul.mubr.bf16.gmra.mxu0 %v527
        %v675 = vpop.f32.mrf.mxu0
        %v676 = vadd.f32 %v339, %v675
        %v677 = vpop.f32.mrf.mxu0
        %v678 = vpop.f32.mrf.mxu0
        %v679 = vadd.f32 %v339, %v678
        %v680 = vpop.f32.mrf.mxu0
        %681 = vmatprep.mubr.bf16.mxu0 0
        %682 = vmatmul.mubr.bf16.gmra.mxu0 %v530
        %v683 = vpop.f32.mrf.mxu0
        %v684 = vadd.f32 %v339, %v683
        %v685 = vpop.f32.mrf.mxu0
        %v686 = vpop.f32.mrf.mxu0
        %v687 = vadd.f32 %v339, %v686
        %v688 = vpop.f32.mrf.mxu0
        %689 = vmatprep.mubr.bf16.mxu0 0
        %690 = vmatmul.mubr.bf16.gmra.mxu0 %v533
        %v691 = vpop.f32.mrf.mxu0
        %v692 = vadd.f32 %v339, %v691
        %v693 = vpop.f32.mrf.mxu0
        %v694 = vpop.f32.mrf.mxu0
        %v695 = vadd.f32 %v339, %v694
        %v696 = vpop.f32.mrf.mxu0
        %697 = vmatprep.mubr.bf16.mxu0 0
        %698 = vmatmul.mubr.bf16.gmra.mxu0 %v536
        %v699 = vpop.f32.mrf.mxu0
        %v700 = vadd.f32 %v339, %v699
        %v701 = vpop.f32.mrf.mxu0
        %v702 = vpop.f32.mrf.mxu0
        %v703 = vadd.f32 %v339, %v702
        %v704 = vpop.f32.mrf.mxu0
        %705 = vmatprep.mubr.bf16.mxu0 0
        %706 = vmatmul.mubr.bf16.gmra.mxu0 %v539
        %v707 = vpop.f32.mrf.mxu0
        %v708 = vadd.f32 %v339, %v707
        %v709 = vpop.f32.mrf.mxu0
        %v710 = vpop.f32.mrf.mxu0
        %v711 = vadd.f32 %v339, %v710
        %v712 = vpop.f32.mrf.mxu0
        %713 = vmatprep.mubr.bf16.mxu0 0
        %714 = vmatmul.mubr.bf16.gmra.mxu0 %v542
        %v715 = vpop.f32.mrf.mxu0
        %v716 = vadd.f32 %v339, %v715
        %v717 = vpop.f32.mrf.mxu0
        %v718 = vpop.f32.mrf.mxu0
        %v719 = vadd.f32 %v339, %v718
        %v720 = vpop.f32.mrf.mxu0
        %721 = vmatprep.mubr.bf16.mxu0 0
        %722 = vmatmul.mubr.bf16.gmra.mxu0 %v545
        %v723 = vpop.f32.mrf.mxu0
        %v724 = vadd.f32 %v339, %v723
        %v725 = vpop.f32.mrf.mxu0
        %v726 = vpop.f32.mrf.mxu0
        %v727 = vadd.f32 %v339, %v726
        %v728 = vpop.f32.mrf.mxu0
        %729 = vmatprep.mubr.bf16.mxu0 0
        %730 = vmatmul.mubr.bf16.gmra.mxu0 %v548
        %v731 = vpop.f32.mrf.mxu0
        %v732 = vadd.f32 %v339, %v731
        %v733 = vpop.f32.mrf.mxu0
        %v734 = vpop.f32.mrf.mxu0
        %v735 = vadd.f32 %v339, %v734
        %v736 = vpop.f32.mrf.mxu0
        %737 = vmatprep.mubr.bf16.mxu0 0
        %738 = vmatmul.mubr.bf16.gmra.mxu0 %v551
        %v739 = vpop.f32.mrf.mxu0
        %v740 = vadd.f32 %v339, %v739
        %v741 = vpop.f32.mrf.mxu0
        %v742 = vpop.f32.mrf.mxu0
        %v743 = vadd.f32 %v339, %v742
        %v744 = vpop.f32.mrf.mxu0
        %745 = vmatprep.mubr.bf16.mxu0 0
        %746 = vmatmul.mubr.bf16.gmra.mxu0 %v554
        %v747 = vpop.f32.mrf.mxu0
        %v748 = vadd.f32 %v339, %v747
        %v749 = vpop.f32.mrf.mxu0
        %v750 = vpop.f32.mrf.mxu0
        %v751 = vadd.f32 %v339, %v750
        %v752 = vpop.f32.mrf.mxu0
        %753 = vmatprep.mubr.bf16.mxu0 0
        %754 = vmatmul.mubr.bf16.gmra.mxu0 %v557
        %v755 = vpop.f32.mrf.mxu0
        %v756 = vadd.f32 %v339, %v755
        %v757 = vpop.f32.mrf.mxu0
        %v758 = vpop.f32.mrf.mxu0
        %v759 = vadd.f32 %v339, %v758
        %v760 = vpop.f32.mrf.mxu0
        %761 = vmatprep.mubr.bf16.mxu0 0
        %762 = vmatmul.mubr.bf16.gmra.mxu0 %v560
        %v763 = vpop.f32.mrf.mxu0
        %v764 = vadd.f32 %v339, %v763
        %v765 = vpop.f32.mrf.mxu0
        %v766 = vpop.f32.mrf.mxu0
        %v767 = vadd.f32 %v339, %v766
        %v768 = vpop.f32.mrf.mxu0
        %769 = vmatprep.mubr.bf16.mxu0 0
        %770 = vmatmul.mubr.bf16.gmra.mxu0 %v563
        %v771 = vpop.f32.mrf.mxu0
        %v772 = vadd.f32 %v339, %v771
        %v773 = vpop.f32.mrf.mxu0
        %v774 = vpop.f32.mrf.mxu0
        %v775 = vadd.f32 %v339, %v774
        %v776 = vpop.f32.mrf.mxu0
        %777 = vmatprep.mubr.bf16.mxu0 0
        %778 = vmatmul.mubr.bf16.gmra.mxu0 %v566
        %v779 = vpop.f32.mrf.mxu0
        %v780 = vadd.f32 %v339, %v779
        %v781 = vpop.f32.mrf.mxu0
        %v782 = vpop.f32.mrf.mxu0
        %v783 = vadd.f32 %v339, %v782
        %v784 = vpop.f32.mrf.mxu0
        %785 = vmatprep.mubr.bf16.mxu0 0
        %786 = vmatmul.mubr.bf16.gmra.mxu0 %v569
        %v787 = vpop.f32.mrf.mxu0
        %v788 = vadd.f32 %v339, %v787
        %v789 = vpop.f32.mrf.mxu0
        %v790 = vpop.f32.mrf.mxu0
        %v791 = vadd.f32 %v339, %v790
        %v792 = vpop.f32.mrf.mxu0
        %793 = vmatprep.mubr.bf16.mxu0 0
        %794 = vmatmul.mubr.bf16.gmra.mxu0 %v572
        %v795 = vpop.f32.mrf.mxu0
        %v796 = vadd.f32 %v339, %v795
        %v797 = vpop.f32.mrf.mxu0
        %v798 = vpop.f32.mrf.mxu0
        %v799 = vadd.f32 %v339, %v798
        %v800 = vpop.f32.mrf.mxu0
        %801 = vmatprep.mubr.bf16.mxu0 0
        %802 = vmatmul.mubr.bf16.gmra.mxu0 %v575
        %v803 = vpop.f32.mrf.mxu0
        %v804 = vadd.f32 %v339, %v803
        %v805 = vpop.f32.mrf.mxu0
        %v806 = vpop.f32.mrf.mxu0
        %v807 = vadd.f32 %v339, %v806
        %v808 = vpop.f32.mrf.mxu0
        %809 = vmatprep.mubr.bf16.mxu0 0
        %810 = vmatmul.mubr.bf16.gmra.mxu0 %v578
        %v811 = vpop.f32.mrf.mxu0
        %v812 = vadd.f32 %v339, %v811
        %v813 = vpop.f32.mrf.mxu0
        %v814 = vpop.f32.mrf.mxu0
        %v815 = vadd.f32 %v339, %v814
        %v816 = vpop.f32.mrf.mxu0
        %817 = vmatprep.mubr.bf16.mxu0 0
        %818 = vmatmul.mubr.bf16.gmra.mxu0 %v581
        %v819 = vpop.f32.mrf.mxu0
        %v820 = vadd.f32 %v339, %v819
        %v821 = vpop.f32.mrf.mxu0
        %v822 = vpop.f32.mrf.mxu0
        %v823 = vadd.f32 %v339, %v822
        %v824 = vpop.f32.mrf.mxu0
        %825 = vmatprep.mubr.bf16.mxu0 0
        %826 = vmatmul.mubr.bf16.gmra.mxu0 %v584
        %v827 = vpop.f32.mrf.mxu0
        %v828 = vadd.f32 %v339, %v827
        %v829 = vpop.f32.mrf.mxu0
        %v830 = vpop.f32.mrf.mxu0
        %v831 = vadd.f32 %v339, %v830
        %v832 = vpop.f32.mrf.mxu0
        %833 = vmatprep.mubr.bf16.mxu0 0
        %834 = vmatmul.mubr.bf16.gmra.mxu0 %v587
        %v835 = vpop.f32.mrf.mxu0
        %v836 = vadd.f32 %v339, %v835
        %v837 = vpop.f32.mrf.mxu0
        %v838 = vpop.f32.mrf.mxu0
        %v839 = vadd.f32 %v339, %v838
        %v840 = vpop.f32.mrf.mxu0
        %841 = vmatprep.mubr.bf16.mxu0 0
        %842 = vmatmul.mubr.bf16.gmra.mxu0 %v590
        %v843 = vpop.f32.mrf.mxu0
        %v844 = vadd.f32 %v339, %v843
        %v845 = vpop.f32.mrf.mxu0
        %v846 = vpop.f32.mrf.mxu0
        %v847 = vadd.f32 %v339, %v846
        %v848 = vpop.f32.mrf.mxu0
        %849 = vmatprep.mubr.bf16.mxu0 0
        %850 = vmatmul.mubr.bf16.gmra.mxu0 %v593
        %v851 = vpop.f32.mrf.mxu0
        %v852 = vadd.f32 %v339, %v851
        %v853 = vpop.f32.mrf.mxu0
        %v854 = vpop.f32.mrf.mxu0
        %v855 = vadd.f32 %v339, %v854
        %v856 = vpop.f32.mrf.mxu0
        %857 = vmatprep.mubr.bf16.mxu0 0
        %858 = vmatmul.mubr.bf16.gmra.mxu0 %v596
        %v859 = vpop.f32.mrf.mxu0
        %v860 = vadd.f32 %v339, %v859
        %v861 = vpop.f32.mrf.mxu0
        %v862 = vpop.f32.mrf.mxu0
        %v863 = vadd.f32 %v339, %v862
        %v864 = vpop.f32.mrf.mxu0
        %865 = vmatprep.mubr.bf16.mxu0 0
        %866 = vmatmul.mubr.bf16.gmra.mxu0 %v599
        %v867 = vpop.f32.mrf.mxu0
        %v868 = vadd.f32 %v339, %v867
        %v869 = vpop.f32.mrf.mxu0
        %v870 = vpop.f32.mrf.mxu0
        %v871 = vadd.f32 %v339, %v870
        %v872 = vpop.f32.mrf.mxu0
        %873 = vmatprep.mubr.bf16.mxu0 0
        %874 = vmatmul.mubr.bf16.gmra.mxu0 %v602
        %v875 = vpop.f32.mrf.mxu0
        %v876 = vadd.f32 %v339, %v875
        %v877 = vpop.f32.mrf.mxu0
        %v878 = vpop.f32.mrf.mxu0
        %v879 = vadd.f32 %v339, %v878
        %v880 = vpop.f32.mrf.mxu0
        %881 = vmatprep.mubr.bf16.mxu0 0
        %882 = vmatmul.mubr.bf16.gmra.mxu0 %v605
        %v883 = vpop.f32.mrf.mxu0
        %v884 = vadd.f32 %v339, %v883
        %v885 = vpop.f32.mrf.mxu0
        %v886 = vpop.f32.mrf.mxu0
        %v887 = vadd.f32 %v339, %v886
        %v888 = vpop.f32.mrf.mxu0
        %889 = vmatprep.mubr.bf16.mxu0 0
        %890 = vmatmul.mubr.bf16.gmra.mxu0 %v608
        %v891 = vpop.f32.mrf.mxu0
        %v892 = vadd.f32 %v339, %v891
        %v893 = vpop.f32.mrf.mxu0
        %v894 = vpop.f32.mrf.mxu0
        %v895 = vadd.f32 %v339, %v894
        %v896 = vpop.f32.mrf.mxu0
        %897 = vmatprep.mubr.bf16.mxu0 0
        %898 = vmatmul.mubr.bf16.gmra.mxu0 %v611
        %v899 = vpop.f32.mrf.mxu0
        %v900 = vadd.f32 %v339, %v899
        %v901 = vpop.f32.mrf.mxu0
        %v902 = vpop.f32.mrf.mxu0
        %v903 = vadd.f32 %v339, %v902
        %v904 = vpop.f32.mrf.mxu0
        %905 = vdwg.mxu0
        %v906 = vmax.f32 %v652, 0.0
        %v907 = vmax.f32 %v655, 0.0
        %v908 = vmax.f32 %v660, 0.0
        %v909 = vmax.f32 %v663, 0.0
        %v910 = vmax.f32 %v668, 0.0
        %v911 = vmax.f32 %v671, 0.0
        %v912 = vmax.f32 %v676, 0.0
        %v913 = vmax.f32 %v679, 0.0
        %v914 = vmax.f32 %v684, 0.0
        %v915 = vmax.f32 %v687, 0.0
        %v916 = vmax.f32 %v692, 0.0
        %v917 = vmax.f32 %v695, 0.0
        %v918 = vmax.f32 %v700, 0.0
        %v919 = vmax.f32 %v703, 0.0
        %v920 = vmax.f32 %v708, 0.0
        %v921 = vmax.f32 %v711, 0.0
        %v922 = vmax.f32 %v716, 0.0
        %v923 = vmax.f32 %v719, 0.0
        %v924 = vmax.f32 %v724, 0.0
        %v925 = vmax.f32 %v727, 0.0
        %v926 = vmax.f32 %v732, 0.0
        %v927 = vmax.f32 %v735, 0.0
        %v928 = vmax.f32 %v740, 0.0
        %v929 = vmax.f32 %v743, 0.0
        %v930 = vmax.f32 %v748, 0.0
        %v931 = vmax.f32 %v751, 0.0
        %v932 = vmax.f32 %v756, 0.0
        %v933 = vmax.f32 %v759, 0.0
        %v934 = vmax.f32 %v764, 0.0
        %v935 = vmax.f32 %v767, 0.0
        %v936 = vmax.f32 %v772, 0.0
        %v937 = vmax.f32 %v775, 0.0
        %v938 = vmax.f32 %v780, 0.0
        %v939 = vmax.f32 %v783, 0.0
        %v940 = vmax.f32 %v788, 0.0
        %v941 = vmax.f32 %v791, 0.0
        %v942 = vmax.f32 %v796, 0.0
        %v943 = vmax.f32 %v799, 0.0
        %v944 = vmax.f32 %v804, 0.0
        %v945 = vmax.f32 %v807, 0.0
        %v946 = vmax.f32 %v812, 0.0
        %v947 = vmax.f32 %v815, 0.0
        %v948 = vmax.f32 %v820, 0.0
        %v949 = vmax.f32 %v823, 0.0
        %v950 = vmax.f32 %v828, 0.0
        %v951 = vmax.f32 %v831, 0.0
        %v952 = vmax.f32 %v836, 0.0
        %v953 = vmax.f32 %v839, 0.0
        %v954 = vmax.f32 %v844, 0.0
        %v955 = vmax.f32 %v847, 0.0
        %v956 = vmax.f32 %v852, 0.0
        %v957 = vmax.f32 %v855, 0.0
        %v958 = vmax.f32 %v860, 0.0
        %v959 = vmax.f32 %v863, 0.0
        %v960 = vmax.f32 %v868, 0.0
        %v961 = vmax.f32 %v871, 0.0
        %v962 = vmax.f32 %v876, 0.0
        %v963 = vmax.f32 %v879, 0.0
        %v964 = vmax.f32 %v884, 0.0
        %v965 = vmax.f32 %v887, 0.0
        %v966 = vmax.f32 %v892, 0.0
        %v967 = vmax.f32 %v895, 0.0
        %v968 = vmax.f32 %v900, 0.0
        %v969 = vmax.f32 %v903, 0.0
        %v970 = vadd.f32 %v906, %v907
        %v971 = vadd.f32 %v970, %v908
        %v972 = vadd.f32 %v971, %v909
        %v973 = vadd.f32 %v972, %v910
        %v974 = vadd.f32 %v973, %v911
        %v975 = vadd.f32 %v974, %v912
        %v976 = vadd.f32 %v975, %v913
        %v977 = vadd.f32 %v976, %v914
        %v978 = vadd.f32 %v977, %v915
        %v979 = vadd.f32 %v978, %v916
        %v980 = vadd.f32 %v979, %v917
        %v981 = vadd.f32 %v980, %v918
        %v982 = vadd.f32 %v981, %v919
        %v983 = vadd.f32 %v982, %v920
        %v984 = vadd.f32 %v983, %v921
        %v985 = vadd.f32 %v984, %v922
        %v986 = vadd.f32 %v985, %v923
        %v987 = vadd.f32 %v986, %v924
        %v988 = vadd.f32 %v987, %v925
        %v989 = vadd.f32 %v988, %v926
        %v990 = vadd.f32 %v989, %v927
        %v991 = vadd.f32 %v990, %v928
        %v992 = vadd.f32 %v991, %v929
        %v993 = vadd.f32 %v992, %v930
        %v994 = vadd.f32 %v993, %v931
        %v995 = vadd.f32 %v994, %v932
        %v996 = vadd.f32 %v995, %v933
        %v997 = vadd.f32 %v996, %v934
        %v998 = vadd.f32 %v997, %v935
        %v999 = vadd.f32 %v998, %v936
        %v1000 = vadd.f32 %v999, %v937
        %v1001 = vrot.slane %v1000, 4
        %v1002 = vadd.f32 %v1000, %v1001
        %v1003 = vrot.slane %v1002, 2
        %v1004 = vadd.f32 %v1002, %v1003
        %v1005 = vrot.slane %v1004, 1
        %v1006 = vadd.f32 %v1004, %v1005
        %v1007 = vadd.f32 %v938, %v939
        %v1008 = vadd.f32 %v1007, %v940
        %v1009 = vadd.f32 %v1008, %v941
        %v1010 = vadd.f32 %v1009, %v942
        %v1011 = vadd.f32 %v1010, %v943
        %v1012 = vadd.f32 %v1011, %v944
        %v1013 = vadd.f32 %v1012, %v945
        %v1014 = vadd.f32 %v1013, %v946
        %v1015 = vadd.f32 %v1014, %v947
        %v1016 = vadd.f32 %v1015, %v948
        %v1017 = vadd.f32 %v1016, %v949
        %v1018 = vadd.f32 %v1017, %v950
        %v1019 = vadd.f32 %v1018, %v951
        %v1020 = vadd.f32 %v1019, %v952
        %v1021 = vadd.f32 %v1020, %v953
        %v1022 = vadd.f32 %v1021, %v954
        %v1023 = vadd.f32 %v1022, %v955
        %v1024 = vadd.f32 %v1023, %v956
        %v1025 = vadd.f32 %v1024, %v957
        %v1026 = vadd.f32 %v1025, %v958
        %v1027 = vadd.f32 %v1026, %v959
        %v1028 = vadd.f32 %v1027, %v960
        %v1029 = vadd.f32 %v1028, %v961
        %v1030 = vadd.f32 %v1029, %v962
        %v1031 = vadd.f32 %v1030, %v963
        %v1032 = vadd.f32 %v1031, %v964
        %v1033 = vadd.f32 %v1032, %v965
        %v1034 = vadd.f32 %v1033, %v966
        %v1035 = vadd.f32 %v1034, %v967
        %v1036 = vadd.f32 %v1035, %v968
        %v1037 = vadd.f32 %v1036, %v969
        %v1038 = vrot.slane %v1037, 4
        %v1039 = vadd.f32 %v1037, %v1038
        %v1040 = vrot.slane %v1039, 2
        %v1041 = vadd.f32 %v1039, %v1040
        %v1042 = vrot.slane %v1041, 1
        %v1043 = vadd.f32 %v1041, %v1042
        %v1044 = vmul.f32 %v1006, 0.00390625
        %v1045 = vmul.f32 %v1043, 0.00390625
        %v1046 = vpack.c.bf16 %v1044, %v1044
        %v1047 = vpack.c.bf16 %v1045, %v1045
        %v1048 = vld [vmem:[%s226] sm:$0xff]
        %v1049 = vld [vmem:[%s226 + $0x8] sm:$0xff]
        %v1050 = vld [vmem:[%s226 + $0x10] sm:$0xff]
        %v1051 = vld [vmem:[%s226 + $0x18] sm:$0xff]
        %v1052 = vld [vmem:[%s226 + $0x20] sm:$0xff]
        %v1053 = vld [vmem:[%s226 + $0x28] sm:$0xff]
        %v1054 = vld [vmem:[%s226 + $0x30] sm:$0xff]
        %v1055 = vld [vmem:[%s226 + $0x38] sm:$0xff]
        %v1056 = vld [vmem:[%s226 + $0x40] sm:$0xff]
        %v1057 = vld [vmem:[%s226 + $0x48] sm:$0xff]
        %v1058 = vld [vmem:[%s226 + $0x50] sm:$0xff]
        %v1059 = vld [vmem:[%s226 + $0x58] sm:$0xff]
        %v1060 = vld [vmem:[%s226 + $0x60] sm:$0xff]
        %v1061 = vld [vmem:[%s226 + $0x68] sm:$0xff]
        %v1062 = vld [vmem:[%s226 + $0x70] sm:$0xff]
        %v1063 = vld [vmem:[%s226 + $0x78] sm:$0xff]
        %v1064 = vld [vmem:[%s226 + $0x80] sm:$0xff]
        %v1065 = vld [vmem:[%s226 + $0x88] sm:$0xff]
        %v1066 = vld [vmem:[%s226 + $0x90] sm:$0xff]
        %v1067 = vld [vmem:[%s226 + $0x98] sm:$0xff]
        %v1068 = vld [vmem:[%s226 + $0xa0] sm:$0xff]
        %v1069 = vld [vmem:[%s226 + $0xa8] sm:$0xff]
        %v1070 = vld [vmem:[%s226 + $0xb0] sm:$0xff]
        %v1071 = vld [vmem:[%s226 + $0xb8] sm:$0xff]
        %v1072 = vld [vmem:[%s226 + $0xc0] sm:$0xff]
        %v1073 = vld [vmem:[%s226 + $0xc8] sm:$0xff]
        %v1074 = vld [vmem:[%s226 + $0xd0] sm:$0xff]
        %v1075 = vld [vmem:[%s226 + $0xd8] sm:$0xff]
        %v1076 = vld [vmem:[%s226 + $0xe0] sm:$0xff]
        %v1077 = vld [vmem:[%s226 + $0xe8] sm:$0xff]
        %v1078 = vld [vmem:[%s226 + $0xf0] sm:$0xff]
        %v1079 = vld [vmem:[%s226 + $0xf8] sm:$0xff]
        %v1080 = vld [vmem:[%s261] sm:$0xf]
        %v1081 = vunpack.c.l.bf16 %v1080
        %v1083 = vlaneseq
        %v1084 = vshrl.u32 %v1083, 7
        %v1085 = vsub.s32 0, %v1084
        %v1086 = vrot.slane %v1081, %v1085
        %v1087 = vlaneseq
        %v1088 = vshrl.u32 %v1087, 7
        %v1089 = vsub.s32 2, %v1088
        %v1090 = vrot.slane %v1081, %v1089
        %v1091 = vlaneseq
        %v1092 = vshrl.u32 %v1091, 7
        %v1093 = vsub.s32 4, %v1092
        %v1094 = vrot.slane %v1081, %v1093
        %v1095 = vlaneseq
        %v1096 = vshrl.u32 %v1095, 7
        %v1097 = vsub.s32 6, %v1096
        %v1098 = vrot.slane %v1081, %v1097
        %v1103 = vlaneseq
        %v1104 = vshrl.u32 %v1103, 7
        %v1105 = vsub.s32 0, %v1104
        %v1106 = vrot.slane %v1086, %v1105
        %v1107 = vlaneseq
        %v1108 = vshrl.u32 %v1107, 7
        %v1109 = vsub.s32 0, %v1108
        %v1110 = vrot.slane %v1090, %v1109
        %v1111 = vlaneseq
        %v1112 = vshrl.u32 %v1111, 7
        %v1113 = vsub.s32 0, %v1112
        %v1114 = vrot.slane %v1094, %v1113
        %v1115 = vlaneseq
        %v1116 = vshrl.u32 %v1115, 7
        %v1117 = vsub.s32 0, %v1116
        %v1118 = vrot.slane %v1098, %v1117
        %v1121 = vunpack.c.l.b16 %v1046
        %v1122 = vunpack.c.l.b16 %v1047
        %vm1123 = vcmask 1041409
        %v1124 = vsel %vm1123, %v1122, %v1121
        %v1125 = vpack.c.b16 %v1124, %v1124
        %v1159 = vunpack.c.l.b16 %v1048
        %v1160 = vunpack.c.h.b16 %v1048
        %v1161 = vunpack.c.l.b16 %v1049
        %v1162 = vunpack.c.h.b16 %v1049
        %v1163 = vunpack.c.l.b16 %v1050
        %v1164 = vunpack.c.h.b16 %v1050
        %v1165 = vunpack.c.l.b16 %v1051
        %v1166 = vunpack.c.h.b16 %v1051
        %v1167 = vunpack.c.l.b16 %v1052
        %v1168 = vunpack.c.h.b16 %v1052
        %v1169 = vunpack.c.l.b16 %v1053
        %v1170 = vunpack.c.h.b16 %v1053
        %v1171 = vunpack.c.l.b16 %v1054
        %v1172 = vunpack.c.h.b16 %v1054
        %v1173 = vunpack.c.l.b16 %v1055
        %v1174 = vunpack.c.h.b16 %v1055
        %v1175 = vunpack.c.l.b16 %v1056
        %v1176 = vunpack.c.h.b16 %v1056
        %v1177 = vunpack.c.l.b16 %v1057
        %v1178 = vunpack.c.h.b16 %v1057
        %v1179 = vunpack.c.l.b16 %v1058
        %v1180 = vunpack.c.h.b16 %v1058
        %v1181 = vunpack.c.l.b16 %v1059
        %v1182 = vunpack.c.h.b16 %v1059
        %v1183 = vunpack.c.l.b16 %v1060
        %v1184 = vunpack.c.h.b16 %v1060
        %v1185 = vunpack.c.l.b16 %v1061
        %v1186 = vunpack.c.h.b16 %v1061
        %v1187 = vunpack.c.l.b16 %v1062
        %v1188 = vunpack.c.h.b16 %v1062
        %v1189 = vunpack.c.l.b16 %v1063
        %v1190 = vunpack.c.h.b16 %v1063
        %v1191 = vunpack.c.l.b16 %v1064
        %v1192 = vunpack.c.h.b16 %v1064
        %v1193 = vunpack.c.l.b16 %v1065
        %v1194 = vunpack.c.h.b16 %v1065
        %v1195 = vunpack.c.l.b16 %v1066
        %v1196 = vunpack.c.h.b16 %v1066
        %v1197 = vunpack.c.l.b16 %v1067
        %v1198 = vunpack.c.h.b16 %v1067
        %v1199 = vunpack.c.l.b16 %v1068
        %v1200 = vunpack.c.h.b16 %v1068
        %v1201 = vunpack.c.l.b16 %v1069
        %v1202 = vunpack.c.h.b16 %v1069
        %v1203 = vunpack.c.l.b16 %v1070
        %v1204 = vunpack.c.h.b16 %v1070
        %v1205 = vunpack.c.l.b16 %v1071
        %v1206 = vunpack.c.h.b16 %v1071
        %v1207 = vunpack.c.l.b16 %v1072
        %v1208 = vunpack.c.h.b16 %v1072
        %v1209 = vunpack.c.l.b16 %v1073
        %v1210 = vunpack.c.h.b16 %v1073
        %v1211 = vunpack.c.l.b16 %v1074
        %v1212 = vunpack.c.h.b16 %v1074
        %v1213 = vunpack.c.l.b16 %v1075
        %v1214 = vunpack.c.h.b16 %v1075
        %v1215 = vunpack.c.l.b16 %v1076
        %v1216 = vunpack.c.h.b16 %v1076
        %v1217 = vunpack.c.l.b16 %v1077
        %v1218 = vunpack.c.h.b16 %v1077
        %v1219 = vunpack.c.l.b16 %v1078
        %v1220 = vunpack.c.h.b16 %v1078
        %v1221 = vunpack.c.l.b16 %v1079
        %v1222 = vunpack.c.h.b16 %v1079
        %v1223 = vpack.c.b16 %v1163, %v1159
        %v1224 = vpack.c.b16 %v1164, %v1160
        %v1225 = vpack.c.b16 %v1165, %v1161
        %v1226 = vpack.c.b16 %v1166, %v1162
        %v1227 = vpack.c.b16 %v1171, %v1167
        %v1228 = vpack.c.b16 %v1172, %v1168
        %v1229 = vpack.c.b16 %v1173, %v1169
        %v1230 = vpack.c.b16 %v1174, %v1170
        %v1231 = vpack.c.b16 %v1179, %v1175
        %v1232 = vpack.c.b16 %v1180, %v1176
        %v1233 = vpack.c.b16 %v1181, %v1177
        %v1234 = vpack.c.b16 %v1182, %v1178
        %v1235 = vpack.c.b16 %v1187, %v1183
        %v1236 = vpack.c.b16 %v1188, %v1184
        %v1237 = vpack.c.b16 %v1189, %v1185
        %v1238 = vpack.c.b16 %v1190, %v1186
        %v1239 = vpack.c.b16 %v1195, %v1191
        %v1240 = vpack.c.b16 %v1196, %v1192
        %v1241 = vpack.c.b16 %v1197, %v1193
        %v1242 = vpack.c.b16 %v1198, %v1194
        %v1243 = vpack.c.b16 %v1203, %v1199
        %v1244 = vpack.c.b16 %v1204, %v1200
        %v1245 = vpack.c.b16 %v1205, %v1201
        %v1246 = vpack.c.b16 %v1206, %v1202
        %v1247 = vpack.c.b16 %v1211, %v1207
        %v1248 = vpack.c.b16 %v1212, %v1208
        %v1249 = vpack.c.b16 %v1213, %v1209
        %v1250 = vpack.c.b16 %v1214, %v1210
        %v1251 = vpack.c.b16 %v1219, %v1215
        %v1252 = vpack.c.b16 %v1220, %v1216
        %v1253 = vpack.c.b16 %v1221, %v1217
        %v1254 = vpack.c.b16 %v1222, %v1218
        %1287 = vmatprep.subr.bf16.mxu0 %v1252
        %1288 = vmatpush1.bf16.msra.mxu0 %v1251
        %1289 = vmatprep.subr.bf16.mxu0 %v1248
        %1290 = vmatpush1.bf16.msra.mxu0 %v1247
        %1291 = vmatprep.subr.bf16.mxu0 %v1244
        %1292 = vmatpush1.bf16.msra.mxu0 %v1243
        %1293 = vmatprep.subr.bf16.mxu0 %v1240
        %1294 = vmatpush1.bf16.msra.mxu0 %v1239
        %1295 = vmatprep.subr.bf16.mxu0 %v1236
        %1296 = vmatpush1.bf16.msra.mxu0 %v1235
        %1297 = vmatprep.subr.bf16.mxu0 %v1232
        %1298 = vmatpush1.bf16.msra.mxu0 %v1231
        %1299 = vmatprep.subr.bf16.mxu0 %v1228
        %1300 = vmatpush1.bf16.msra.mxu0 %v1227
        %1301 = vmatprep.subr.bf16.mxu0 %v1224
        %1302 = vmatpush1.bf16.msra.mxu0 %v1223
        %1303 = vmatprep.subr.bf16.mxu0 0
        %1304 = vmatpush2.bf16.msra.mxu0 0
        %1305 = vmatprep.subr.bf16.mxu0 0
        %1306 = vmatpush2.bf16.msra.mxu0 0
        %1307 = vmatprep.subr.bf16.mxu0 0
        %1308 = vmatpush2.bf16.msra.mxu0 0
        %1309 = vmatprep.subr.bf16.mxu0 0
        %1310 = vmatpush2.bf16.msra.mxu0 0
        %1311 = vmatprep.subr.bf16.mxu0 0
        %1312 = vmatpush2.bf16.msra.mxu0 0
        %1313 = vmatprep.subr.bf16.mxu0 0
        %1314 = vmatpush2.bf16.msra.mxu0 0
        %1315 = vmatprep.subr.bf16.mxu0 0
        %1316 = vmatpush2.bf16.msra.mxu0 0
        %1317 = vmatprep.subr.bf16.mxu0 0
        %1318 = vmatpush2.bf16.msra.mxu0 0
        %1319 = vmatprep.mubr.bf16.mxu0 0
        %1320 = vmatmul.mubr.bf16.gmra.mxu0 %v1125
        %v1321 = vpop.f32.mrf.mxu0
        %v1322 = vadd.f32 %v1106, %v1321
        %v1323 = vpop.f32.mrf.mxu0
        %v1324 = vadd.f32 %v1110, %v1323
        %v1325 = vpop.f32.mrf.mxu0
        %v1326 = vpop.f32.mrf.mxu0
        %1327 = vdwg.mxu0
        %1328 = vmatprep.subr.bf16.mxu0 %v1254
        %1329 = vmatpush1.bf16.msra.mxu0 %v1253
        %1330 = vmatprep.subr.bf16.mxu0 %v1250
        %1331 = vmatpush1.bf16.msra.mxu0 %v1249
        %1332 = vmatprep.subr.bf16.mxu0 %v1246
        %1333 = vmatpush1.bf16.msra.mxu0 %v1245
        %1334 = vmatprep.subr.bf16.mxu0 %v1242
        %1335 = vmatpush1.bf16.msra.mxu0 %v1241
        %1336 = vmatprep.subr.bf16.mxu0 %v1238
        %1337 = vmatpush1.bf16.msra.mxu0 %v1237
        %1338 = vmatprep.subr.bf16.mxu0 %v1234
        %1339 = vmatpush1.bf16.msra.mxu0 %v1233
        %1340 = vmatprep.subr.bf16.mxu0 %v1230
        %1341 = vmatpush1.bf16.msra.mxu0 %v1229
        %1342 = vmatprep.subr.bf16.mxu0 %v1226
        %1343 = vmatpush1.bf16.msra.mxu0 %v1225
        %1344 = vmatprep.subr.bf16.mxu0 0
        %1345 = vmatpush2.bf16.msra.mxu0 0
        %1346 = vmatprep.subr.bf16.mxu0 0
        %1347 = vmatpush2.bf16.msra.mxu0 0
        %1348 = vmatprep.subr.bf16.mxu0 0
        %1349 = vmatpush2.bf16.msra.mxu0 0
        %1350 = vmatprep.subr.bf16.mxu0 0
        %1351 = vmatpush2.bf16.msra.mxu0 0
        %1352 = vmatprep.subr.bf16.mxu0 0
        %1353 = vmatpush2.bf16.msra.mxu0 0
        %1354 = vmatprep.subr.bf16.mxu0 0
        %1355 = vmatpush2.bf16.msra.mxu0 0
        %1356 = vmatprep.subr.bf16.mxu0 0
        %1357 = vmatpush2.bf16.msra.mxu0 0
        %1358 = vmatprep.subr.bf16.mxu0 0
        %1359 = vmatpush2.bf16.msra.mxu0 0
        %1360 = vmatprep.mubr.bf16.mxu0 0
        %1361 = vmatmul.mubr.bf16.gmra.mxu0 %v1125
        %v1362 = vpop.f32.mrf.mxu0
        %v1363 = vadd.f32 %v1114, %v1362
        %v1364 = vpop.f32.mrf.mxu0
        %v1365 = vadd.f32 %v1118, %v1364
        %v1366 = vpop.f32.mrf.mxu0
        %v1367 = vpop.f32.mrf.mxu0
        %1368 = vdwg.mxu0
        %v1373 = vcombine.low %v1322, %v1324
        %v1374 = vcombine.low %v1363, %v1365
        %v1376 = vunpack.c.l.s4 1983009808
        %v1377 = vunpack.c.0.s8 %v1376
        %v1378 = vlaneseq
        %v1379 = vshrl.u32 %v1378, 7
        %v1380 = vsub.s32 %v1377, %v1379
        %v1381 = vrot.slane %v1373, %v1380
        %v1383 = vunpack.c.l.s4 1983009808
        %v1384 = vunpack.c.0.s8 %v1383
        %v1385 = vlaneseq
        %v1386 = vshrl.u32 %v1385, 7
        %v1387 = vsub.s32 %v1384, %v1386
        %v1388 = vrot.slane %v1374, %v1387
        %v1389 = vcombine.low %v1381, %v1388
        %1391 = vst [vmem:[%s256] sm:$0xff] %v1389
        %s1392 = sand.u32 %s145, 1
        %s1393 = scalar_lea.sflag [#allocation4], %s1392
        %s1394 = sand.u32 %s145, 1
        %s1395 = smul.addr %s1394, 8
        %s1396 = scalar_lea.vmem [#allocation5], %s1395
        // Predicated region
        $region45: #{tpu_custom_call.1} parent=39 // pred_check
          %p1397 = pneg %p155
        $region46: #{tpu_custom_call.1} parent=39 // pred_check_branch
          %1399 = sbr.rel (%p1397) target = $region48
        $region47: #{tpu_custom_call.1} parent=39 // pred_region
          %s1400 = smul.u32 4, %s22
          %s1402 = ssub.s32 128, 128
          %1403 = vsyncadd %s1393, %s1402
          %s1404 = smul.addr %s1400, 32
          %s1405 = scalar_lea.hbm %s5, %s1404
          %s1407 = sshll.u32 %s1396, 4
          %s1408 = int_to_ptr.vmem [resolvable:$true] %s1407
          %1410 = dma.vmem_to_hbm [thread:$0]  %s1408, 128, %s1405, %s1393
        $region48: #{tpu_custom_call.1} parent=39 // pred_fallthru
          _
      $region40: #{tpu_custom_call.1} parent=5 // pred_fallthru
        _
      %p1411 = scmp.le.s32.totalorder 2, %s17
      // Predicated region
      $region49: #{tpu_custom_call.1} parent=5 // pred_check
        %p1412 = pneg %p1411
      $region50: #{tpu_custom_call.1} parent=5 // pred_check_branch
        %1414 = sbr.rel (%p1412) target = $region52
      $region51: #{tpu_custom_call.1} parent=5 // pred_region
        %s1415 = ssub.s32 %s17, 2
        // Predicated region
        $region53: #{tpu_custom_call.1} parent=51 // pred_check
          %p1416 = pneg %p161
        $region54: #{tpu_custom_call.1} parent=51 // pred_check_branch
          %1418 = sbr.rel (%p1416) target = $region56
        $region55: #{tpu_custom_call.1} parent=51 // pred_region
          %s1419 = sand.u32 %s146, 1
          %s1420 = scalar_lea.sflag [#allocation4], %s1419
          %s1421 = sand.u32 %s146, 1
          %s1422 = smul.addr %s1421, 8
          %s1423 = scalar_lea.vmem [#allocation5], %s1422
          %1424 = dma.done %s1420, 128
        $region56: #{tpu_custom_call.1} parent=51 // pred_fallthru
          _
      $region52: #{tpu_custom_call.1} parent=5 // pred_fallthru
        _
    $region6: #{tpu_custom_call.1} parent=1 // loop_footer
      %s21 = sadd.s32 1, %s17
    $region7: #{tpu_custom_call.1} parent=1 // loop_footer_branch
      %16 = sbr.rel target = $region3
    $region8: #{tpu_custom_call.1} parent=1 // loop_exit
      _
    %1425 = vsyncpa [#allocation3], 1
    %s1426 = scalar_lea.sflag [#allocation3], 1
    %1427 = vsyncpa %s1426, 1
    %1428 = vsyncpa [#allocation4], 1
    %s1429 = scalar_lea.sflag [#allocation4], 1
    %1430 = vsyncpa %s1429, 1

</llo_original>
